<compile_context>
chip_gen: v7x
topology: tpu7x:2x2x1
jax: 0.10.0
libtpu: 0.0.40
codegen_flags: <defaults>
</compile_context>

<pallas_src>
import functools

import jax
import jax.numpy as jnp
from jax.experimental import pallas as pl
from jax.experimental.pallas import tpu as pltpu


H1 = 512
H2 = 256


def _round_up(x, m):
    return (x + m - 1) // m * m


def _cdiv(a, b):
    return (a + b - 1) // b


def _choose_tile_b(B, tile_b):
    """Batch tile: one full block for small batches, else >=2 grid steps
    (keeps both v7x TensorCores busy) with a lane/sublane-friendly tile."""
    tile_b = max(256, _round_up(tile_b, 256))
    if B <= tile_b and B < 512:
        return B                      # single block; block dims == array dims
    return min(tile_b, _round_up(_cdiv(B, 2), 256))


def _critic_kernel(s_ref, a_ref, w1s_ref, w1a_ref, b1_ref,
                   w2_ref, b2_ref, w3_ref, b3_ref, q_ref):
    # In-kernel bf16 cast of the activations (VPU work hidden under the MXU);
    # the wrapper never rewrites state/action in HBM.
    s = s_ref[...].astype(jnp.bfloat16)
    a = a_ref[...].astype(jnp.bfloat16)

    # Layer 1: split-K dots replace concat([state, action]) @ W1.
    # bf16 operands, f32 accumulation on the MXU.
    # TODO(synk): S=24 / A=8 contraction dims under-fill the MXU; padding them
    # to multiples of 16 would shave a few % but needs a wrapper-side repack.
    h1 = jnp.dot(s, w1s_ref[...], preferred_element_type=jnp.float32)
    h1 = h1 + jnp.dot(a, w1a_ref[...], preferred_element_type=jnp.float32)
    h1 = jnp.maximum(h1 + b1_ref[...], 0.0)

    # Layer 2: [TB, 512] @ [512, 256] (bf16 inputs, f32 accumulation), ReLU.
    h2 = jnp.dot(h1.astype(jnp.bfloat16), w2_ref[...],
                 preferred_element_type=jnp.float32)
    h2 = jnp.maximum(h2 + b2_ref[...], 0.0)

    # Layer 3 (out_features = 1): VPU multiply + lane reduce, stored lane-dense
    # as a [1, 1, TB] row (no masked (TB, 1) column stores).
    q = jnp.sum(h2 * w3_ref[...], axis=-1)                 # [TB]
    q_ref[...] = (q + b3_ref[0, 0]).reshape(1, 1, -1).astype(q_ref.dtype)


@functools.partial(jax.jit, static_argnames=("tile_b",))
def critic_forward(state, action, kparams, tile_b=2048):
    """Fused Critic forward. state: [B, S], action: [B, A] -> q: [B, 1] (f32)."""
    w1s, w1a, b1, w2, b2, w3_row, b3 = kparams
    B, S = state.shape
    A = action.shape[1]

    TB = _choose_tile_b(B, tile_b)
    num_tiles = _cdiv(B, TB)

    flops = 2 * B * ((S + A) * H1 + H1 * H2 + H2)
    bytes_accessed = int(
        state.size * state.dtype.itemsize
        + action.size * action.dtype.itemsize
        + sum(int(p.size) * p.dtype.itemsize for p in kparams)
        + B * 4)

    q = pl.pallas_call(
        _critic_kernel,
        out_shape=jax.ShapeDtypeStruct((num_tiles, 1, TB), jnp.float32),
        grid=(num_tiles,),
        in_specs=[
            pl.BlockSpec((TB, S), lambda i: (i, 0)),        # state tile
            pl.BlockSpec((TB, A), lambda i: (i, 0)),        # action tile
            pl.BlockSpec((S, H1), lambda i: (0, 0)),        # W1[:S]   (VMEM-resident)
            pl.BlockSpec((A, H1), lambda i: (0, 0)),        # W1[S:]   (VMEM-resident)
            pl.BlockSpec((1, H1), lambda i: (0, 0)),        # b1
            pl.BlockSpec((H1, H2), lambda i: (0, 0)),       # W2       (VMEM-resident)
            pl.BlockSpec((1, H2), lambda i: (0, 0)),        # b2
            pl.BlockSpec((1, H2), lambda i: (0, 0)),        # W3 row
            pl.BlockSpec(memory_space=pltpu.MemorySpace.SMEM),  # b3 scalar
        ],
        out_specs=pl.BlockSpec((1, 1, TB), lambda i: (i, 0, 0)),  # lane-dense q row
        compiler_params=pltpu.CompilerParams(
            dimension_semantics=("parallel",),              # megacore-shard the batch axis
            vmem_limit_bytes=32 * 1024 * 1024,
        ),
        cost_estimate=pl.CostEstimate(
            flops=flops, transcendentals=0, bytes_accessed=bytes_accessed),
    )(state, action, w1s, w1a, b1, w2, b2, w3_row, b3)

    # (num_tiles, 1, TB) slab -> [B, 1]; garbage rows from the ragged last
    # block (if any) are sliced away here.
    return q.reshape(-1)[:B].reshape(B, 1)


def init_critic_params(key, state_dim, action_dim):
    """f32 params mirroring nn.Linear's U(-1/sqrt(fan_in), 1/sqrt(fan_in)).

    Weights stored as [in, out]; biases as [1, out]."""
    dims = [(state_dim + action_dim, H1), (H1, H2), (H2, 1)]
    params = []
    for fan_in, fan_out in dims:
        key, kw, kb = jax.random.split(key, 3)
        bound = 1.0 / (fan_in ** 0.5)
        w = jax.random.uniform(kw, (fan_in, fan_out), jnp.float32, -bound, bound)
        b = jax.random.uniform(kb, (1, fan_out), jnp.float32, -bound, bound)
        params += [w, b]
    return tuple(params)


def prepare_kernel_params(params_f32, state_dim):
    """Split W1, cast MXU-facing weights to bf16, shape W3/b3 for the VPU epilogue."""
    w1, b1, w2, b2, w3, b3 = params_f32
    w1s = w1[:state_dim].astype(jnp.bfloat16)          # [S, 512]
    w1a = w1[state_dim:].astype(jnp.bfloat16)          # [A, 512]
    w2b = w2.astype(jnp.bfloat16)                      # [512, 256]
    w3_row = w3.reshape(1, -1).astype(jnp.float32)     # [1, 256]
    b3s = b3.reshape(1, 1).astype(jnp.float32)         # [1, 1] -> SMEM scalar
    return (w1s, w1a, b1.astype(jnp.float32), w2b,
            b2.astype(jnp.float32), w3_row, b3s)


def _reference_matched(state, action, kparams):
    """Pure-JAX reference with the same bf16 casts as the kernel."""
    w1s, w1a, b1, w2, b2, w3_row, b3 = kparams
    sb = state.astype(jnp.bfloat16)
    ab = action.astype(jnp.bfloat16)
    h1 = (jnp.dot(sb, w1s, preferred_element_type=jnp.float32)
          + jnp.dot(ab, w1a, preferred_element_type=jnp.float32))
    h1 = jnp.maximum(h1 + b1, 0.0)
    h2 = jnp.dot(h1.astype(jnp.bfloat16), w2, preferred_element_type=jnp.float32)
    h2 = jnp.maximum(h2 + b2, 0.0)
    return jnp.sum(h2 * w3_row, axis=-1, keepdims=True) + b3[0, 0]


def _reference_f32(state, action, params_f32):
    """Full-precision reference mirroring the PyTorch module exactly."""
    w1, b1, w2, b2, w3, b3 = params_f32
    sa = jnp.concatenate([state, action], axis=1)
    h = jnp.maximum(sa @ w1 + b1, 0.0)
    h = jnp.maximum(h @ w2 + b2, 0.0)
    return h @ w3 + b3


if __name__ == "__main__":
    state_dim, action_dim = 24, 8

    key = jax.random.PRNGKey(0)
    kp, ks, ka = jax.random.split(key, 3)

    params_f32 = init_critic_params(kp, state_dim, action_dim)
    kparams = prepare_kernel_params(params_f32, state_dim)

    # Small-batch check (single grid step, block dims == array dims).
    batch = 2
    state = jax.random.normal(ks, (batch, state_dim), jnp.float32)
    action = jax.random.normal(ka, (batch, action_dim), jnp.float32)

    q = critic_forward(state, action, kparams)
    jax.block_until_ready(q)
    assert q.shape == (batch, 1)
    ref_m = _reference_matched(state, action, kparams)
    ref_f = _reference_f32(state, action, params_f32)
    assert jnp.allclose(q, ref_m, atol=5e-3, rtol=5e-3)
    assert jnp.allclose(q, ref_f, atol=1e-1, rtol=1e-1)   # bf16 vs f32 sanity

    # Multi-tile check: grid > 1 with a ragged last input block (no padding in
    # the wrapper) and lane-dense output reshape.
    batch2 = 600
    ks2, ka2 = jax.random.split(jax.random.PRNGKey(1))
    state2 = jax.random.normal(ks2, (batch2, state_dim), jnp.float32)
    action2 = jax.random.normal(ka2, (batch2, action_dim), jnp.float32)
    q2 = critic_forward(state2, action2, kparams)          # TB=512, grid=2
    jax.block_until_ready(q2)
    assert q2.shape == (batch2, 1)
    ref2 = _reference_matched(state2, action2, kparams)
    assert jnp.allclose(q2, ref2, atol=5e-3, rtol=5e-3)

    # Small explicit tile (exercises >2 grid steps path).
    q3 = critic_forward(state2, action2, kparams, tile_b=256)
    jax.block_until_ready(q3)
    assert jnp.allclose(q3, ref2, atol=5e-3, rtol=5e-3)

    print("KERNEL_OK")
</pallas_src>

<mosaic_0001>
module attributes {stable_mosaic.version = 11 : i64} {
  func.func @_critic_kernel(%arg0: i32, %arg1: memref<2x24xf32, #tpu.memory_space<vmem>>, %arg2: memref<2x8xf32, #tpu.memory_space<vmem>>, %arg3: memref<24x512xbf16, #tpu.memory_space<vmem>>, %arg4: memref<8x512xbf16, #tpu.memory_space<vmem>>, %arg5: memref<1x512xf32, #tpu.memory_space<vmem>>, %arg6: memref<512x256xbf16, #tpu.memory_space<vmem>>, %arg7: memref<1x256xf32, #tpu.memory_space<vmem>>, %arg8: memref<1x256xf32, #tpu.memory_space<vmem>>, %arg9: memref<1x1xf32, #tpu.memory_space<smem>>, %arg10: memref<1x1x2xf32, #tpu.memory_space<vmem>>) attributes {dimension_semantics = [#tpu.dimension_semantics<parallel>], iteration_bounds = array<i64: 1>, scalar_prefetch = 0 : i64, scratch_operands = 0 : i64, tpu.core_type = #tpu.core_type<tc>, window_params = [{transform_indices = @transform_0, window_bounds = array<i64: 2, 24>}, {transform_indices = @transform_1, window_bounds = array<i64: 2, 8>}, {pipeline_mode = #tpu.pipeline_mode<synchronous>, transform_indices = @transform_2, window_bounds = array<i64: 24, 512>}, {pipeline_mode = #tpu.pipeline_mode<synchronous>, transform_indices = @transform_3, window_bounds = array<i64: 8, 512>}, {pipeline_mode = #tpu.pipeline_mode<synchronous>, transform_indices = @transform_4, window_bounds = array<i64: 1, 512>}, {pipeline_mode = #tpu.pipeline_mode<synchronous>, transform_indices = @transform_5, window_bounds = array<i64: 512, 256>}, {pipeline_mode = #tpu.pipeline_mode<synchronous>, transform_indices = @transform_6, window_bounds = array<i64: 1, 256>}, {pipeline_mode = #tpu.pipeline_mode<synchronous>, transform_indices = @transform_7, window_bounds = array<i64: 1, 256>}, {transform_indices = @transform_8, window_bounds = array<i64: 1, 1>}, {transform_indices = @transform_9, window_bounds = array<i64: 1, 1, 2>}]} {
    %c0 = arith.constant 0 : index
    %c0_0 = arith.constant 0 : index
    %0 = vector.load %arg1[%c0, %c0_0] : memref<2x24xf32, #tpu.memory_space<vmem>>, vector<2x24xf32>
    %1 = arith.truncf %0 : vector<2x24xf32> to vector<2x24xbf16>
    %c0_1 = arith.constant 0 : index
    %c0_2 = arith.constant 0 : index
    %2 = vector.load %arg2[%c0_1, %c0_2] : memref<2x8xf32, #tpu.memory_space<vmem>>, vector<2x8xf32>
    %3 = arith.truncf %2 : vector<2x8xf32> to vector<2x8xbf16>
    %c0_3 = arith.constant 0 : index
    %c0_4 = arith.constant 0 : index
    %4 = vector.load %arg3[%c0_3, %c0_4] : memref<24x512xbf16, #tpu.memory_space<vmem>>, vector<24x512xbf16>
    %cst = arith.constant dense<0.000000e+00> : vector<2x512xf32>
    %5 = tpu.matmul %1, %4, %cst {dimension_numbers = #tpu.dot_dimension_numbers<[1], [0], [0], [1], [0, 0, 1, 1], [], []>} : vector<2x24xbf16>, vector<24x512xbf16>, vector<2x512xf32> -> vector<2x512xf32>
    %c0_5 = arith.constant 0 : index
    %c0_6 = arith.constant 0 : index
    %6 = vector.load %arg4[%c0_5, %c0_6] : memref<8x512xbf16, #tpu.memory_space<vmem>>, vector<8x512xbf16>
    %cst_7 = arith.constant dense<0.000000e+00> : vector<2x512xf32>
    %7 = tpu.matmul %3, %6, %cst_7 {dimension_numbers = #tpu.dot_dimension_numbers<[1], [0], [0], [1], [0, 0, 1, 1], [], []>} : vector<2x8xbf16>, vector<8x512xbf16>, vector<2x512xf32> -> vector<2x512xf32>
    %8 = arith.addf %5, %7 : vector<2x512xf32>
    %c0_8 = arith.constant 0 : index
    %c0_9 = arith.constant 0 : index
    %9 = vector.load %arg5[%c0_8, %c0_9] : memref<1x512xf32, #tpu.memory_space<vmem>>, vector<1x512xf32>
    %10 = vector.broadcast %9 : vector<1x512xf32> to vector<2x512xf32>
    %11 = arith.addf %8, %10 : vector<2x512xf32>
    %cst_10 = arith.constant 0.000000e+00 : f32
    %12 = vector.broadcast %cst_10 : f32 to vector<2x512xf32>
    %13 = arith.maximumf %11, %12 : vector<2x512xf32>
    %14 = arith.truncf %13 : vector<2x512xf32> to vector<2x512xbf16>
    %c0_11 = arith.constant 0 : index
    %c0_12 = arith.constant 0 : index
    %15 = vector.load %arg6[%c0_11, %c0_12] : memref<512x256xbf16, #tpu.memory_space<vmem>>, vector<512x256xbf16>
    %cst_13 = arith.constant dense<0.000000e+00> : vector<2x256xf32>
    %16 = tpu.matmul %14, %15, %cst_13 {dimension_numbers = #tpu.dot_dimension_numbers<[1], [0], [0], [1], [0, 0, 1, 1], [], []>} : vector<2x512xbf16>, vector<512x256xbf16>, vector<2x256xf32> -> vector<2x256xf32>
    %c0_14 = arith.constant 0 : index
    %c0_15 = arith.constant 0 : index
    %17 = vector.load %arg7[%c0_14, %c0_15] : memref<1x256xf32, #tpu.memory_space<vmem>>, vector<1x256xf32>
    %18 = vector.broadcast %17 : vector<1x256xf32> to vector<2x256xf32>
    %19 = arith.addf %16, %18 : vector<2x256xf32>
    %cst_16 = arith.constant 0.000000e+00 : f32
    %20 = vector.broadcast %cst_16 : f32 to vector<2x256xf32>
    %21 = arith.maximumf %19, %20 : vector<2x256xf32>
    %c0_17 = arith.constant 0 : index
    %c0_18 = arith.constant 0 : index
    %22 = vector.load %arg8[%c0_17, %c0_18] : memref<1x256xf32, #tpu.memory_space<vmem>>, vector<1x256xf32>
    %23 = vector.broadcast %22 : vector<1x256xf32> to vector<2x256xf32>
    %24 = arith.mulf %21, %23 : vector<2x256xf32>
    %cst_19 = arith.constant dense<0.000000e+00> : vector<2xf32>
    %25 = vector.multi_reduction <add>, %24, %cst_19 [1] : vector<2x256xf32> to vector<2xf32>
    %c0_20 = arith.constant 0 : index
    %c0_21 = arith.constant 0 : index
    %26 = memref.load %arg9[%c0_20, %c0_21] : memref<1x1xf32, #tpu.memory_space<smem>>
    %27 = vector.broadcast %26 : f32 to vector<2xf32>
    %28 = arith.addf %25, %27 : vector<2xf32>
    %29 = vector.shape_cast %28 : vector<2xf32> to vector<1x1x2xf32>
    %c0_22 = arith.constant 0 : index
    %c0_23 = arith.constant 0 : index
    %c0_24 = arith.constant 0 : index
    %30 = vector.load %arg10[%c0_22, %c0_23, %c0_24] : memref<1x1x2xf32, #tpu.memory_space<vmem>>, vector<1x1x2xf32>
    tpu.vector_store %arg10[%c0_22, %c0_23, %c0_24], %29 {strides = array<i32>} : memref<1x1x2xf32, #tpu.memory_space<vmem>>, vector<1x1x2xf32>,
    return
  }
  func.func @transform_0(%arg0: i32) -> (i32, i32) {
    %c0_i32 = arith.constant 0 : i32
    %c0_i32_0 = arith.constant 0 : i32
    return %arg0, %c0_i32 : i32, i32
  }
  func.func @transform_1(%arg0: i32) -> (i32, i32) {
    %c0_i32 = arith.constant 0 : i32
    %c0_i32_0 = arith.constant 0 : i32
    return %arg0, %c0_i32 : i32, i32
  }
  func.func @transform_2(%arg0: i32) -> (i32, i32) {
    %c0_i32 = arith.constant 0 : i32
    %c0_i32_0 = arith.constant 0 : i32
    %c0_i32_1 = arith.constant 0 : i32
    return %c0_i32, %c0_i32_0 : i32, i32
  }
  func.func @transform_3(%arg0: i32) -> (i32, i32) {
    %c0_i32 = arith.constant 0 : i32
    %c0_i32_0 = arith.constant 0 : i32
    %c0_i32_1 = arith.constant 0 : i32
    return %c0_i32, %c0_i32_0 : i32, i32
  }
  func.func @transform_4(%arg0: i32) -> (i32, i32) {
    %c0_i32 = arith.constant 0 : i32
    %c0_i32_0 = arith.constant 0 : i32
    %c0_i32_1 = arith.constant 0 : i32
    return %c0_i32, %c0_i32_0 : i32, i32
  }
  func.func @transform_5(%arg0: i32) -> (i32, i32) {
    %c0_i32 = arith.constant 0 : i32
    %c0_i32_0 = arith.constant 0 : i32
    %c0_i32_1 = arith.constant 0 : i32
    return %c0_i32, %c0_i32_0 : i32, i32
  }
  func.func @transform_6(%arg0: i32) -> (i32, i32) {
    %c0_i32 = arith.constant 0 : i32
    %c0_i32_0 = arith.constant 0 : i32
    %c0_i32_1 = arith.constant 0 : i32
    return %c0_i32, %c0_i32_0 : i32, i32
  }
  func.func @transform_7(%arg0: i32) -> (i32, i32) {
    %c0_i32 = arith.constant 0 : i32
    %c0_i32_0 = arith.constant 0 : i32
    %c0_i32_1 = arith.constant 0 : i32
    return %c0_i32, %c0_i32_0 : i32, i32
  }
  func.func @transform_8(%arg0: i32) -> (i32, i32) {
    %c0_i32 = arith.constant 0 : i32
    %c0_i32_0 = arith.constant 0 : i32
    %c0_i32_1 = arith.constant 0 : i32
    return %c0_i32, %c0_i32_0 : i32, i32
  }
  func.func @transform_9(%arg0: i32) -> (i32, i32, i32) {
    %c0_i32 = arith.constant 0 : i32
    %c0_i32_0 = arith.constant 0 : i32
    %c0_i32_1 = arith.constant 0 : i32
    return %arg0, %c0_i32, %c0_i32_0 : i32, i32, i32
  }
}

</mosaic_0001>

<llo_original>
// kernel: critic_forward.1
$region0: #{critic_forward.1}
  #allocation0 [shape = 'u32[]', space=smem, size = 0x4, offset = 0x4, fixed_abs, tag = 'smem constant byte address 0x4 - core index']
  #allocation1 [shape = 'u32[144,128]{1,0:T(1,128)}', space=vmem, size = 0x12000, scoped, tag = 'internal scratch']
  #allocation2 [shape = 'f32[1,1]{1,0:T(1,128)S(6)}', space=smem, size = 0x200, scoped, tag = 'scoped memory for critic_forward.1']
  %s0 = inlined_call_operand.vmem [shape: f32[2,24], index: 0, kind: input, shape index: {}]
  %s1 = inlined_call_operand.hbm [shape: f32[2,8], index: 1, kind: input, shape index: {}]
  %s2 = inlined_call_operand.hbm [shape: bf16[24,512], index: 2, kind: input, shape index: {}]
  %s3 = inlined_call_operand.hbm [shape: bf16[8,512], index: 3, kind: input, shape index: {}]
  %s4 = inlined_call_operand.vmem [shape: f32[1,512], index: 4, kind: input, shape index: {}]
  %s5 = inlined_call_operand.hbm [shape: bf16[512,256], index: 5, kind: input, shape index: {}]
  %s6 = inlined_call_operand.vmem [shape: f32[1,256], index: 6, kind: input, shape index: {}]
  %s7 = inlined_call_operand.vmem [shape: f32[1,256], index: 7, kind: input, shape index: {}]
  %s8 = inlined_call_operand.<no memory space> [shape: f32[1,1], index: 8, kind: input, shape index: {}]
  %s9 = inlined_call_operand.hbm [shape: f32[1,1,2], index: 9, kind: output, shape index: {}]
  %s10 = sld [smem:[#allocation0]]
  $region62: #{critic_forward.1} parent=0
    _
  %s12 = ssub.s32 1, %s10
  %s13 = scalar_select 0, %s12, %s10
  %14 = sst [smem:[#allocation2]] %s8
  $region1: #{critic_forward.1} parent=0
    #allocation3 [shape = 'u8[1024]{0}', space=vmem, size = 0x400, scoped, tag = 'input window, operand 1, single buffered']
    #allocation4 [shape = 's32[1]{0}', space=sflag, size = 0x4, scoped, tag = 'scoped memory for critic_forward.1']
    #allocation5 [shape = 's32[1]{0}', space=sflag, size = 0x4, scoped, tag = 'scoped memory for critic_forward.1']
    #allocation6 [shape = 'u8[24576]{0}', space=vmem, size = 0x6000, scoped, tag = 'input window, operand 2, single buffered']
    #allocation7 [shape = 's32[1]{0}', space=sflag, size = 0x4, scoped, tag = 'scoped memory for critic_forward.1']
    #allocation8 [shape = 'u8[8192]{0}', space=vmem, size = 0x2000, scoped, tag = 'input window, operand 3, single buffered']
    #allocation9 [shape = 'u8[262144]{0}', space=vmem, size = 0x40000, scoped, tag = 'input window, operand 5, single buffered']
    #allocation10 [shape = 's32[1]{0}', space=sflag, size = 0x4, scoped, tag = 'scoped memory for critic_forward.1']
    #allocation11 [shape = 'u8[512]{0}', space=vmem, size = 0x400, scoped, tag = 'output window, operand 0, single buffered']
    %15 = vsyncpa [#allocation4], 0
    %16 = vsyncpa [#allocation7], 0
    %17 = vsyncpa [#allocation10], 0
    %18 = vsyncpa [#allocation5], 0
    // Predicated region
    $region2: #{critic_forward.1} parent=1 // pred_check
      _
    $region3: #{critic_forward.1} parent=1 // pred_check_branch
      %20 = sbr.rel (0) target = $region5
    $region4: #{critic_forward.1} parent=1 // pred_region
      _
    $region5: #{critic_forward.1} parent=1 // pred_fallthru
      _
    // Predicated region
    $region6: #{critic_forward.1} parent=1 // pred_check
      _
    $region7: #{critic_forward.1} parent=1 // pred_check_branch
      %22 = sbr.rel (0) target = $region9
    $region8: #{critic_forward.1} parent=1 // pred_region
      %s24 = ssub.s32 32, 32
      %25 = vsyncadd [#allocation4], %s24
      %s27 = sshll.u32 [#allocation3], 4
      %s28 = int_to_ptr.vmem [resolvable:$true] %s27
      %30 = dma.hbm_to_vmem [thread:$0]  %s1, 32, %s28, [#allocation4]
    $region9: #{critic_forward.1} parent=1 // pred_fallthru
      _
    // Predicated region
    $region10: #{critic_forward.1} parent=1 // pred_check
      _
    $region11: #{critic_forward.1} parent=1 // pred_check_branch
      %32 = sbr.rel (0) target = $region13
    $region12: #{critic_forward.1} parent=1 // pred_region
      %s34 = ssub.s32 768, 768
      %35 = vsyncadd [#allocation7], %s34
      %s36 = sshll.u32 [#allocation6], 4
      %s37 = int_to_ptr.vmem [resolvable:$true] %s36
      %42 = dma.hbm_to_vmem [thread:$0]  %s2, 768, %s37, [#allocation7], 256, 256, 16
    $region13: #{critic_forward.1} parent=1 // pred_fallthru
      _
    // Predicated region
    $region14: #{critic_forward.1} parent=1 // pred_check
      _
    $region15: #{critic_forward.1} parent=1 // pred_check_branch
      %44 = sbr.rel (0) target = $region17
    $region16: #{critic_forward.1} parent=1 // pred_region
      %s46 = ssub.s32 256, 256
      %47 = vsyncadd [#allocation7], %s46
      %s49 = sshll.u32 [#allocation8], 4
      %s50 = int_to_ptr.vmem [resolvable:$true] %s49
      %52 = dma.hbm_to_vmem [thread:$0]  %s3, 256, %s50, [#allocation7]
    $region17: #{critic_forward.1} parent=1 // pred_fallthru
      _
    // Predicated region
    $region18: #{critic_forward.1} parent=1 // pred_check
      _
    $region19: #{critic_forward.1} parent=1 // pred_check_branch
      %54 = sbr.rel (0) target = $region21
    $region20: #{critic_forward.1} parent=1 // pred_region
      _
    $region21: #{critic_forward.1} parent=1 // pred_fallthru
      _
    // Predicated region
    $region22: #{critic_forward.1} parent=1 // pred_check
      _
    $region23: #{critic_forward.1} parent=1 // pred_check_branch
      %56 = sbr.rel (0) target = $region25
    $region24: #{critic_forward.1} parent=1 // pred_region
      %s58 = ssub.s32 8192, 8192
      %59 = vsyncadd [#allocation10], %s58
      %s60 = sshll.u32 [#allocation9], 4
      %s61 = int_to_ptr.vmem [resolvable:$true] %s60
      %66 = dma.hbm_to_vmem [thread:$0]  %s5, 8192, %s61, [#allocation10], 128, 128, 8
    $region25: #{critic_forward.1} parent=1 // pred_fallthru
      _
    // Predicated region
    $region26: #{critic_forward.1} parent=1 // pred_check
      _
    $region27: #{critic_forward.1} parent=1 // pred_check_branch
      %68 = sbr.rel (0) target = $region29
    $region28: #{critic_forward.1} parent=1 // pred_region
      _
    $region29: #{critic_forward.1} parent=1 // pred_fallthru
      _
    // Predicated region
    $region30: #{critic_forward.1} parent=1 // pred_check
      _
    $region31: #{critic_forward.1} parent=1 // pred_check_branch
      %70 = sbr.rel (0) target = $region33
    $region32: #{critic_forward.1} parent=1 // pred_region
      _
    $region33: #{critic_forward.1} parent=1 // pred_fallthru
      _
    // Predicated region
    $region34: #{critic_forward.1} parent=1 // pred_check
      _
    $region35: #{critic_forward.1} parent=1 // pred_check_branch
      %72 = sbr.rel (0) target = $region37
    $region36: #{critic_forward.1} parent=1 // pred_region
      _
    $region37: #{critic_forward.1} parent=1 // pred_fallthru
      _
    // Predicated region
    $region38: #{critic_forward.1} parent=1 // pred_check
      _
    $region39: #{critic_forward.1} parent=1 // pred_check_branch
      %74 = sbr.rel (0) target = $region41
    $region40: #{critic_forward.1} parent=1 // pred_region
      %75 = dma.done [#allocation4], 32
    $region41: #{critic_forward.1} parent=1 // pred_fallthru
      _
    // Predicated region
    $region42: #{critic_forward.1} parent=1 // pred_check
      _
    $region43: #{critic_forward.1} parent=1 // pred_check_branch
      %77 = sbr.rel (0) target = $region45
    $region44: #{critic_forward.1} parent=1 // pred_region
      %78 = dma.done [#allocation7], 768
    $region45: #{critic_forward.1} parent=1 // pred_fallthru
      _
    // Predicated region
    $region46: #{critic_forward.1} parent=1 // pred_check
      _
    $region47: #{critic_forward.1} parent=1 // pred_check_branch
      %80 = sbr.rel (0) target = $region49
    $region48: #{critic_forward.1} parent=1 // pred_region
      %81 = dma.done [#allocation7], 256
    $region49: #{critic_forward.1} parent=1 // pred_fallthru
      _
    // Predicated region
    $region50: #{critic_forward.1} parent=1 // pred_check
      _
    $region51: #{critic_forward.1} parent=1 // pred_check_branch
      %83 = sbr.rel (0) target = $region53
    $region52: #{critic_forward.1} parent=1 // pred_region
      %84 = dma.done [#allocation10], 8192
    $region53: #{critic_forward.1} parent=1 // pred_fallthru
      _
    %v86 = vld [vmem:[%s0] sm:$0x3]
    %v87 = vpack.c.bf16 %v86, %v86
    %v88 = vld [vmem:[#allocation3] sm:$0x3]
    %v89 = vpack.c.bf16 %v88, %v88
    %v90 = vld [vmem:[#allocation6] sm:$0xff]
    %v91 = vld [vmem:[#allocation6 + $0x8] sm:$0xff]
    %v92 = vld [vmem:[#allocation6 + $0x10] sm:$0xff]
    %v93 = vld [vmem:[#allocation6 + $0x18] sm:$0xff]
    %v94 = vld [vmem:[#allocation6 + $0x20] sm:$0xff]
    %v95 = vld [vmem:[#allocation6 + $0x28] sm:$0xff]
    %v96 = vld [vmem:[#allocation8] sm:$0xff]
    %v97 = vld [vmem:[#allocation8 + $0x8] sm:$0xff]
    %v100 = vunpack.c.l.b16 %v96
    %v101 = vunpack.c.h.b16 %v96
    %v102 = vunpack.c.l.b16 %v97
    %v103 = vunpack.c.h.b16 %v97
    %v104 = vpack.c.b16 %v100, %v100
    %v105 = vpack.c.b16 %v101, %v101
    %v106 = vpack.c.b16 %v102, %v102
    %v107 = vpack.c.b16 %v103, %v103
    %vm108 = vcmask 64512
    %v110 = vsel %vm108, %v89, 0
    %vm112 = vcmask 1043456
    %v114 = vsel %vm112, %v104, 0
    %v117 = vsel %vm112, %v105, 0
    %v120 = vsel %vm112, %v106, 0
    %v123 = vsel %vm112, %v107, 0
    %125 = vmatprep.subr.bf16.mxu0 %v117
    %126 = vmatpush1.bf16.msra.mxu0 %v114
    %127 = vmatprep.subr.bf16.mxu0 0
    %128 = vmatpush1.bf16.msra.mxu0 0
    %129 = vmatprep.subr.bf16.mxu0 0
    %130 = vmatpush1.bf16.msra.mxu0 0
    %131 = vmatprep.subr.bf16.mxu0 0
    %132 = vmatpush1.bf16.msra.mxu0 0
    %133 = vmatprep.subr.bf16.mxu0 0
    %134 = vmatpush1.bf16.msra.mxu0 0
    %135 = vmatprep.subr.bf16.mxu0 0
    %136 = vmatpush1.bf16.msra.mxu0 0
    %137 = vmatprep.subr.bf16.mxu0 0
    %138 = vmatpush1.bf16.msra.mxu0 0
    %139 = vmatprep.subr.bf16.mxu0 0
    %140 = vmatpush1.bf16.msra.mxu0 0
    %141 = vmatprep.subr.bf16.mxu0 0
    %142 = vmatpush1.bf16.msra.mxu0 0
    %143 = vmatprep.subr.bf16.mxu0 0
    %144 = vmatpush1.bf16.msra.mxu0 0
    %145 = vmatprep.subr.bf16.mxu0 0
    %146 = vmatpush1.bf16.msra.mxu0 0
    %147 = vmatprep.subr.bf16.mxu0 0
    %148 = vmatpush1.bf16.msra.mxu0 0
    %149 = vmatprep.subr.bf16.mxu0 0
    %150 = vmatpush1.bf16.msra.mxu0 0
    %151 = vmatprep.subr.bf16.mxu0 0
    %152 = vmatpush1.bf16.msra.mxu0 0
    %153 = vmatprep.subr.bf16.mxu0 0
    %154 = vmatpush1.bf16.msra.mxu0 0
    %155 = vmatprep.subr.bf16.mxu0 0
    %156 = vmatpush1.bf16.msra.mxu0 0
    %157 = vmatprep.mubr.bf16.mxu0 0
    %158 = vmatmul.mubr.bf16.gmra.mrb[0].mxu0 %v110
    %v159 = vpop.f32.mrb[0].mxu0
    %v160 = vadd.f32 0.0, %v159
    %v161 = vpop.f32.mrb[0].mxu0
    %v162 = vadd.f32 0.0, %v161
    %v163 = vpop.f32.mrb[0].mxu0
    %v164 = vpop.f32.mrb[0].mxu0
    %165 = vdwg.mxu0
    %166 = vmatprep.subr.bf16.mxu0 %v123
    %167 = vmatpush1.bf16.msra.mxu0 %v120
    %168 = vmatprep.subr.bf16.mxu0 0
    %169 = vmatpush1.bf16.msra.mxu0 0
    %170 = vmatprep.subr.bf16.mxu0 0
    %171 = vmatpush1.bf16.msra.mxu0 0
    %172 = vmatprep.subr.bf16.mxu0 0
    %173 = vmatpush1.bf16.msra.mxu0 0
    %174 = vmatprep.subr.bf16.mxu0 0
    %175 = vmatpush1.bf16.msra.mxu0 0
    %176 = vmatprep.subr.bf16.mxu0 0
    %177 = vmatpush1.bf16.msra.mxu0 0
    %178 = vmatprep.subr.bf16.mxu0 0
    %179 = vmatpush1.bf16.msra.mxu0 0
    %180 = vmatprep.subr.bf16.mxu0 0
    %181 = vmatpush1.bf16.msra.mxu0 0
    %182 = vmatprep.subr.bf16.mxu0 0
    %183 = vmatpush1.bf16.msra.mxu0 0
    %184 = vmatprep.subr.bf16.mxu0 0
    %185 = vmatpush1.bf16.msra.mxu0 0
    %186 = vmatprep.subr.bf16.mxu0 0
    %187 = vmatpush1.bf16.msra.mxu0 0
    %188 = vmatprep.subr.bf16.mxu0 0
    %189 = vmatpush1.bf16.msra.mxu0 0
    %190 = vmatprep.subr.bf16.mxu0 0
    %191 = vmatpush1.bf16.msra.mxu0 0
    %192 = vmatprep.subr.bf16.mxu0 0
    %193 = vmatpush1.bf16.msra.mxu0 0
    %194 = vmatprep.subr.bf16.mxu0 0
    %195 = vmatpush1.bf16.msra.mxu0 0
    %196 = vmatprep.subr.bf16.mxu0 0
    %197 = vmatpush1.bf16.msra.mxu0 0
    %198 = vmatprep.mubr.bf16.mxu0 0
    %199 = vmatmul.mubr.bf16.gmra.mrb[0].mxu0 %v110
    %v200 = vpop.f32.mrb[0].mxu0
    %v201 = vadd.f32 0.0, %v200
    %v202 = vpop.f32.mrb[0].mxu0
    %v203 = vadd.f32 0.0, %v202
    %v204 = vpop.f32.mrb[0].mxu0
    %v205 = vpop.f32.mrb[0].mxu0
    %206 = vdwg.mxu0
    %v213 = vunpack.c.l.b16 %v90
    %v214 = vunpack.c.h.b16 %v90
    %v215 = vunpack.c.l.b16 %v91
    %v216 = vunpack.c.h.b16 %v91
    %v217 = vunpack.c.l.b16 %v92
    %v218 = vunpack.c.h.b16 %v92
    %v219 = vunpack.c.l.b16 %v93
    %v220 = vunpack.c.h.b16 %v93
    %v221 = vunpack.c.l.b16 %v94
    %v222 = vunpack.c.h.b16 %v94
    %v223 = vunpack.c.l.b16 %v95
    %v224 = vunpack.c.h.b16 %v95
    %v225 = vpack.c.b16 %v217, %v213
    %v226 = vpack.c.b16 %v218, %v214
    %v227 = vpack.c.b16 %v219, %v215
    %v228 = vpack.c.b16 %v220, %v216
    %v229 = vpack.c.b16 %v221, %v221
    %v230 = vpack.c.b16 %v222, %v222
    %v231 = vpack.c.b16 %v223, %v223
    %v232 = vpack.c.b16 %v224, %v224
    %vm237 = vcmask 195584
    %v239 = vsel %vm237, %v87, 0
    %v242 = vsel %vm112, %v229, 0
    %v245 = vsel %vm112, %v230, 0
    %v248 = vsel %vm112, %v231, 0
    %v251 = vsel %vm112, %v232, 0
    %253 = vmatprep.subr.bf16.mxu0 %v226
    %254 = vmatpush1.bf16.msra.mxu0 %v225
    %255 = vmatprep.subr.bf16.mxu0 %v245
    %256 = vmatpush1.bf16.msra.mxu0 %v242
    %257 = vmatprep.subr.bf16.mxu0 0
    %258 = vmatpush1.bf16.msra.mxu0 0
    %259 = vmatprep.subr.bf16.mxu0 0
    %260 = vmatpush1.bf16.msra.mxu0 0
    %261 = vmatprep.subr.bf16.mxu0 0
    %262 = vmatpush1.bf16.msra.mxu0 0
    %263 = vmatprep.subr.bf16.mxu0 0
    %264 = vmatpush1.bf16.msra.mxu0 0
    %265 = vmatprep.subr.bf16.mxu0 0
    %266 = vmatpush1.bf16.msra.mxu0 0
    %267 = vmatprep.subr.bf16.mxu0 0
    %268 = vmatpush1.bf16.msra.mxu0 0
    %269 = vmatprep.subr.bf16.mxu0 0
    %270 = vmatpush1.bf16.msra.mxu0 0
    %271 = vmatprep.subr.bf16.mxu0 0
    %272 = vmatpush1.bf16.msra.mxu0 0
    %273 = vmatprep.subr.bf16.mxu0 0
    %274 = vmatpush1.bf16.msra.mxu0 0
    %275 = vmatprep.subr.bf16.mxu0 0
    %276 = vmatpush1.bf16.msra.mxu0 0
    %277 = vmatprep.subr.bf16.mxu0 0
    %278 = vmatpush1.bf16.msra.mxu0 0
    %279 = vmatprep.subr.bf16.mxu0 0
    %280 = vmatpush1.bf16.msra.mxu0 0
    %281 = vmatprep.subr.bf16.mxu0 0
    %282 = vmatpush1.bf16.msra.mxu0 0
    %283 = vmatprep.subr.bf16.mxu0 0
    %284 = vmatpush1.bf16.msra.mxu0 0
    %285 = vmatprep.mubr.bf16.mxu0 0
    %286 = vmatmul.mubr.bf16.gmra.mrb[0].mxu0 %v239
    %v287 = vpop.f32.mrb[0].mxu0
    %v288 = vadd.f32 %v160, %v287
    %v289 = vpop.f32.mrb[0].mxu0
    %v290 = vadd.f32 %v162, %v289
    %v291 = vpop.f32.mrb[0].mxu0
    %v292 = vpop.f32.mrb[0].mxu0
    %293 = vdwg.mxu0
    %294 = vmatprep.subr.bf16.mxu0 %v228
    %295 = vmatpush1.bf16.msra.mxu0 %v227
    %296 = vmatprep.subr.bf16.mxu0 %v251
    %297 = vmatpush1.bf16.msra.mxu0 %v248
    %298 = vmatprep.subr.bf16.mxu0 0
    %299 = vmatpush1.bf16.msra.mxu0 0
    %300 = vmatprep.subr.bf16.mxu0 0
    %301 = vmatpush1.bf16.msra.mxu0 0
    %302 = vmatprep.subr.bf16.mxu0 0
    %303 = vmatpush1.bf16.msra.mxu0 0
    %304 = vmatprep.subr.bf16.mxu0 0
    %305 = vmatpush1.bf16.msra.mxu0 0
    %306 = vmatprep.subr.bf16.mxu0 0
    %307 = vmatpush1.bf16.msra.mxu0 0
    %308 = vmatprep.subr.bf16.mxu0 0
    %309 = vmatpush1.bf16.msra.mxu0 0
    %310 = vmatprep.subr.bf16.mxu0 0
    %311 = vmatpush1.bf16.msra.mxu0 0
    %312 = vmatprep.subr.bf16.mxu0 0
    %313 = vmatpush1.bf16.msra.mxu0 0
    %314 = vmatprep.subr.bf16.mxu0 0
    %315 = vmatpush1.bf16.msra.mxu0 0
    %316 = vmatprep.subr.bf16.mxu0 0
    %317 = vmatpush1.bf16.msra.mxu0 0
    %318 = vmatprep.subr.bf16.mxu0 0
    %319 = vmatpush1.bf16.msra.mxu0 0
    %320 = vmatprep.subr.bf16.mxu0 0
    %321 = vmatpush1.bf16.msra.mxu0 0
    %322 = vmatprep.subr.bf16.mxu0 0
    %323 = vmatpush1.bf16.msra.mxu0 0
    %324 = vmatprep.subr.bf16.mxu0 0
    %325 = vmatpush1.bf16.msra.mxu0 0
    %326 = vmatprep.mubr.bf16.mxu0 0
    %327 = vmatmul.mubr.bf16.gmra.mrb[0].mxu0 %v239
    %v328 = vpop.f32.mrb[0].mxu0
    %v329 = vadd.f32 %v201, %v328
    %v330 = vpop.f32.mrb[0].mxu0
    %v331 = vadd.f32 %v203, %v330
    %v332 = vpop.f32.mrb[0].mxu0
    %v333 = vpop.f32.mrb[0].mxu0
    %334 = vdwg.mxu0
    %v335 = vld [vmem:[%s4] sm:$0xf]
    %v337 = vlaneseq
    %v338 = vshrl.u32 %v337, 7
    %v339 = vsub.s32 0, %v338
    %v340 = vrot.slane %v335, %v339
    %v341 = vlaneseq
    %v342 = vshrl.u32 %v341, 7
    %v343 = vsub.s32 1, %v342
    %v344 = vrot.slane %v335, %v343
    %v345 = vlaneseq
    %v346 = vshrl.u32 %v345, 7
    %v347 = vsub.s32 2, %v346
    %v348 = vrot.slane %v335, %v347
    %v349 = vlaneseq
    %v350 = vshrl.u32 %v349, 7
    %v351 = vsub.s32 3, %v350
    %v352 = vrot.slane %v335, %v351
    %v357 = vadd.f32 %v288, %v340
    %v358 = vadd.f32 %v290, %v344
    %v359 = vadd.f32 %v329, %v348
    %v360 = vadd.f32 %v331, %v352
    %v361 = vmax.f32 %v357, 0.0
    %v362 = vmax.f32 %v358, 0.0
    %v363 = vmax.f32 %v359, 0.0
    %v364 = vmax.f32 %v360, 0.0
    %v365 = vpack.c.bf16 %v361, %v361
    %v366 = vpack.c.bf16 %v362, %v362
    %v367 = vpack.c.bf16 %v363, %v363
    %v368 = vpack.c.bf16 %v364, %v364
    %v369 = vld [vmem:[#allocation9] sm:$0xff]
    %v370 = vld [vmem:[#allocation9 + $0x8] sm:$0xff]
    %v371 = vld [vmem:[#allocation9 + $0x10] sm:$0xff]
    %v372 = vld [vmem:[#allocation9 + $0x18] sm:$0xff]
    %v373 = vld [vmem:[#allocation9 + $0x20] sm:$0xff]
    %v374 = vld [vmem:[#allocation9 + $0x28] sm:$0xff]
    %v375 = vld [vmem:[#allocation9 + $0x30] sm:$0xff]
    %v376 = vld [vmem:[#allocation9 + $0x38] sm:$0xff]
    %v377 = vld [vmem:[#allocation9 + $0x40] sm:$0xff]
    %v378 = vld [vmem:[#allocation9 + $0x48] sm:$0xff]
    %v379 = vld [vmem:[#allocation9 + $0x50] sm:$0xff]
    %v380 = vld [vmem:[#allocation9 + $0x58] sm:$0xff]
    %v381 = vld [vmem:[#allocation9 + $0x60] sm:$0xff]
    %v382 = vld [vmem:[#allocation9 + $0x68] sm:$0xff]
    %v383 = vld [vmem:[#allocation9 + $0x70] sm:$0xff]
    %v384 = vld [vmem:[#allocation9 + $0x78] sm:$0xff]
    %v385 = vld [vmem:[#allocation9 + $0x80] sm:$0xff]
    %v386 = vld [vmem:[#allocation9 + $0x88] sm:$0xff]
    %v387 = vld [vmem:[#allocation9 + $0x90] sm:$0xff]
    %v388 = vld [vmem:[#allocation9 + $0x98] sm:$0xff]
    %v389 = vld [vmem:[#allocation9 + $0xa0] sm:$0xff]
    %v390 = vld [vmem:[#allocation9 + $0xa8] sm:$0xff]
    %v391 = vld [vmem:[#allocation9 + $0xb0] sm:$0xff]
    %v392 = vld [vmem:[#allocation9 + $0xb8] sm:$0xff]
    %v393 = vld [vmem:[#allocation9 + $0xc0] sm:$0xff]
    %v394 = vld [vmem:[#allocation9 + $0xc8] sm:$0xff]
    %v395 = vld [vmem:[#allocation9 + $0xd0] sm:$0xff]
    %v396 = vld [vmem:[#allocation9 + $0xd8] sm:$0xff]
    %v397 = vld [vmem:[#allocation9 + $0xe0] sm:$0xff]
    %v398 = vld [vmem:[#allocation9 + $0xe8] sm:$0xff]
    %v399 = vld [vmem:[#allocation9 + $0xf0] sm:$0xff]
    %v400 = vld [vmem:[#allocation9 + $0xf8] sm:$0xff]
    %v401 = vld [vmem:[#allocation9 + $0x100] sm:$0xff]
    %v402 = vld [vmem:[#allocation9 + $0x108] sm:$0xff]
    %v403 = vld [vmem:[#allocation9 + $0x110] sm:$0xff]
    %v404 = vld [vmem:[#allocation9 + $0x118] sm:$0xff]
    %v405 = vld [vmem:[#allocation9 + $0x120] sm:$0xff]
    %v406 = vld [vmem:[#allocation9 + $0x128] sm:$0xff]
    %v407 = vld [vmem:[#allocation9 + $0x130] sm:$0xff]
    %v408 = vld [vmem:[#allocation9 + $0x138] sm:$0xff]
    %v409 = vld [vmem:[#allocation9 + $0x140] sm:$0xff]
    %v410 = vld [vmem:[#allocation9 + $0x148] sm:$0xff]
    %v411 = vld [vmem:[#allocation9 + $0x150] sm:$0xff]
    %v412 = vld [vmem:[#allocation9 + $0x158] sm:$0xff]
    %v413 = vld [vmem:[#allocation9 + $0x160] sm:$0xff]
    %v414 = vld [vmem:[#allocation9 + $0x168] sm:$0xff]
    %v415 = vld [vmem:[#allocation9 + $0x170] sm:$0xff]
    %v416 = vld [vmem:[#allocation9 + $0x178] sm:$0xff]
    %v417 = vld [vmem:[#allocation9 + $0x180] sm:$0xff]
    %v418 = vld [vmem:[#allocation9 + $0x188] sm:$0xff]
    %v419 = vld [vmem:[#allocation9 + $0x190] sm:$0xff]
    %v420 = vld [vmem:[#allocation9 + $0x198] sm:$0xff]
    %v421 = vld [vmem:[#allocation9 + $0x1a0] sm:$0xff]
    %v422 = vld [vmem:[#allocation9 + $0x1a8] sm:$0xff]
    %v423 = vld [vmem:[#allocation9 + $0x1b0] sm:$0xff]
    %v424 = vld [vmem:[#allocation9 + $0x1b8] sm:$0xff]
    %v425 = vld [vmem:[#allocation9 + $0x1c0] sm:$0xff]
    %v426 = vld [vmem:[#allocation9 + $0x1c8] sm:$0xff]
    %v427 = vld [vmem:[#allocation9 + $0x1d0] sm:$0xff]
    %v428 = vld [vmem:[#allocation9 + $0x1d8] sm:$0xff]
    %v429 = vld [vmem:[#allocation9 + $0x1e0] sm:$0xff]
    %v430 = vld [vmem:[#allocation9 + $0x1e8] sm:$0xff]
    %v431 = vld [vmem:[#allocation9 + $0x1f0] sm:$0xff]
    %v432 = vld [vmem:[#allocation9 + $0x1f8] sm:$0xff]
    %v433 = vld [vmem:[%s6] sm:$0x3]
    %v435 = vlaneseq
    %v436 = vshrl.u32 %v435, 7
    %v437 = vsub.s32 0, %v436
    %v438 = vrot.slane %v433, %v437
    %v439 = vlaneseq
    %v440 = vshrl.u32 %v439, 7
    %v441 = vsub.s32 1, %v440
    %v442 = vrot.slane %v433, %v441
    %v509 = vunpack.c.l.b16 %v369
    %v510 = vunpack.c.h.b16 %v369
    %v511 = vunpack.c.l.b16 %v370
    %v512 = vunpack.c.h.b16 %v370
    %v513 = vunpack.c.l.b16 %v371
    %v514 = vunpack.c.h.b16 %v371
    %v515 = vunpack.c.l.b16 %v372
    %v516 = vunpack.c.h.b16 %v372
    %v517 = vunpack.c.l.b16 %v373
    %v518 = vunpack.c.h.b16 %v373
    %v519 = vunpack.c.l.b16 %v374
    %v520 = vunpack.c.h.b16 %v374
    %v521 = vunpack.c.l.b16 %v375
    %v522 = vunpack.c.h.b16 %v375
    %v523 = vunpack.c.l.b16 %v376
    %v524 = vunpack.c.h.b16 %v376
    %v525 = vunpack.c.l.b16 %v377
    %v526 = vunpack.c.h.b16 %v377
    %v527 = vunpack.c.l.b16 %v378
    %v528 = vunpack.c.h.b16 %v378
    %v529 = vunpack.c.l.b16 %v379
    %v530 = vunpack.c.h.b16 %v379
    %v531 = vunpack.c.l.b16 %v380
    %v532 = vunpack.c.h.b16 %v380
    %v533 = vunpack.c.l.b16 %v381
    %v534 = vunpack.c.h.b16 %v381
    %v535 = vunpack.c.l.b16 %v382
    %v536 = vunpack.c.h.b16 %v382
    %v537 = vunpack.c.l.b16 %v383
    %v538 = vunpack.c.h.b16 %v383
    %v539 = vunpack.c.l.b16 %v384
    %v540 = vunpack.c.h.b16 %v384
    %v541 = vunpack.c.l.b16 %v385
    %v542 = vunpack.c.h.b16 %v385
    %v543 = vunpack.c.l.b16 %v386
    %v544 = vunpack.c.h.b16 %v386
    %v545 = vunpack.c.l.b16 %v387
    %v546 = vunpack.c.h.b16 %v387
    %v547 = vunpack.c.l.b16 %v388
    %v548 = vunpack.c.h.b16 %v388
    %v549 = vunpack.c.l.b16 %v389
    %v550 = vunpack.c.h.b16 %v389
    %v551 = vunpack.c.l.b16 %v390
    %v552 = vunpack.c.h.b16 %v390
    %v553 = vunpack.c.l.b16 %v391
    %v554 = vunpack.c.h.b16 %v391
    %v555 = vunpack.c.l.b16 %v392
    %v556 = vunpack.c.h.b16 %v392
    %v557 = vunpack.c.l.b16 %v393
    %v558 = vunpack.c.h.b16 %v393
    %v559 = vunpack.c.l.b16 %v394
    %v560 = vunpack.c.h.b16 %v394
    %v561 = vunpack.c.l.b16 %v395
    %v562 = vunpack.c.h.b16 %v395
    %v563 = vunpack.c.l.b16 %v396
    %v564 = vunpack.c.h.b16 %v396
    %v565 = vunpack.c.l.b16 %v397
    %v566 = vunpack.c.h.b16 %v397
    %v567 = vunpack.c.l.b16 %v398
    %v568 = vunpack.c.h.b16 %v398
    %v569 = vunpack.c.l.b16 %v399
    %v570 = vunpack.c.h.b16 %v399
    %v571 = vunpack.c.l.b16 %v400
    %v572 = vunpack.c.h.b16 %v400
    %v573 = vunpack.c.l.b16 %v401
    %v574 = vunpack.c.h.b16 %v401
    %v575 = vunpack.c.l.b16 %v402
    %v576 = vunpack.c.h.b16 %v402
    %v577 = vunpack.c.l.b16 %v403
    %v578 = vunpack.c.h.b16 %v403
    %v579 = vunpack.c.l.b16 %v404
    %v580 = vunpack.c.h.b16 %v404
    %v581 = vunpack.c.l.b16 %v405
    %v582 = vunpack.c.h.b16 %v405
    %v583 = vunpack.c.l.b16 %v406
    %v584 = vunpack.c.h.b16 %v406
    %v585 = vunpack.c.l.b16 %v407
    %v586 = vunpack.c.h.b16 %v407
    %v587 = vunpack.c.l.b16 %v408
    %v588 = vunpack.c.h.b16 %v408
    %v589 = vunpack.c.l.b16 %v409
    %v590 = vunpack.c.h.b16 %v409
    %v591 = vunpack.c.l.b16 %v410
    %v592 = vunpack.c.h.b16 %v410
    %v593 = vunpack.c.l.b16 %v411
    %v594 = vunpack.c.h.b16 %v411
    %v595 = vunpack.c.l.b16 %v412
    %v596 = vunpack.c.h.b16 %v412
    %v597 = vunpack.c.l.b16 %v413
    %v598 = vunpack.c.h.b16 %v413
    %v599 = vunpack.c.l.b16 %v414
    %v600 = vunpack.c.h.b16 %v414
    %v601 = vunpack.c.l.b16 %v415
    %v602 = vunpack.c.h.b16 %v415
    %v603 = vunpack.c.l.b16 %v416
    %v604 = vunpack.c.h.b16 %v416
    %v605 = vunpack.c.l.b16 %v417
    %v606 = vunpack.c.h.b16 %v417
    %v607 = vunpack.c.l.b16 %v418
    %v608 = vunpack.c.h.b16 %v418
    %v609 = vunpack.c.l.b16 %v419
    %v610 = vunpack.c.h.b16 %v419
    %v611 = vunpack.c.l.b16 %v420
    %v612 = vunpack.c.h.b16 %v420
    %v613 = vunpack.c.l.b16 %v421
    %v614 = vunpack.c.h.b16 %v421
    %v615 = vunpack.c.l.b16 %v422
    %v616 = vunpack.c.h.b16 %v422
    %v617 = vunpack.c.l.b16 %v423
    %v618 = vunpack.c.h.b16 %v423
    %v619 = vunpack.c.l.b16 %v424
    %v620 = vunpack.c.h.b16 %v424
    %v621 = vunpack.c.l.b16 %v425
    %v622 = vunpack.c.h.b16 %v425
    %v623 = vunpack.c.l.b16 %v426
    %v624 = vunpack.c.h.b16 %v426
    %v625 = vunpack.c.l.b16 %v427
    %v626 = vunpack.c.h.b16 %v427
    %v627 = vunpack.c.l.b16 %v428
    %v628 = vunpack.c.h.b16 %v428
    %v629 = vunpack.c.l.b16 %v429
    %v630 = vunpack.c.h.b16 %v429
    %v631 = vunpack.c.l.b16 %v430
    %v632 = vunpack.c.h.b16 %v430
    %v633 = vunpack.c.l.b16 %v431
    %v634 = vunpack.c.h.b16 %v431
    %v635 = vunpack.c.l.b16 %v432
    %v636 = vunpack.c.h.b16 %v432
    %v637 = vpack.c.b16 %v511, %v509
    %v638 = vpack.c.b16 %v512, %v510
    %v639 = vpack.c.b16 %v515, %v513
    %v640 = vpack.c.b16 %v516, %v514
    %v641 = vpack.c.b16 %v519, %v517
    %v642 = vpack.c.b16 %v520, %v518
    %v643 = vpack.c.b16 %v523, %v521
    %v644 = vpack.c.b16 %v524, %v522
    %v645 = vpack.c.b16 %v527, %v525
    %v646 = vpack.c.b16 %v528, %v526
    %v647 = vpack.c.b16 %v531, %v529
    %v648 = vpack.c.b16 %v532, %v530
    %v649 = vpack.c.b16 %v535, %v533
    %v650 = vpack.c.b16 %v536, %v534
    %v651 = vpack.c.b16 %v539, %v537
    %v652 = vpack.c.b16 %v540, %v538
    %v653 = vpack.c.b16 %v543, %v541
    %v654 = vpack.c.b16 %v544, %v542
    %v655 = vpack.c.b16 %v547, %v545
    %v656 = vpack.c.b16 %v548, %v546
    %v657 = vpack.c.b16 %v551, %v549
    %v658 = vpack.c.b16 %v552, %v550
    %v659 = vpack.c.b16 %v555, %v553
    %v660 = vpack.c.b16 %v556, %v554
    %v661 = vpack.c.b16 %v559, %v557
    %v662 = vpack.c.b16 %v560, %v558
    %v663 = vpack.c.b16 %v563, %v561
    %v664 = vpack.c.b16 %v564, %v562
    %v665 = vpack.c.b16 %v567, %v565
    %v666 = vpack.c.b16 %v568, %v566
    %v667 = vpack.c.b16 %v571, %v569
    %v668 = vpack.c.b16 %v572, %v570
    %v669 = vpack.c.b16 %v575, %v573
    %v670 = vpack.c.b16 %v576, %v574
    %v671 = vpack.c.b16 %v579, %v577
    %v672 = vpack.c.b16 %v580, %v578
    %v673 = vpack.c.b16 %v583, %v581
    %v674 = vpack.c.b16 %v584, %v582
    %v675 = vpack.c.b16 %v587, %v585
    %v676 = vpack.c.b16 %v588, %v586
    %v677 = vpack.c.b16 %v591, %v589
    %v678 = vpack.c.b16 %v592, %v590
    %v679 = vpack.c.b16 %v595, %v593
    %v680 = vpack.c.b16 %v596, %v594
    %v681 = vpack.c.b16 %v599, %v597
    %v682 = vpack.c.b16 %v600, %v598
    %v683 = vpack.c.b16 %v603, %v601
    %v684 = vpack.c.b16 %v604, %v602
    %v685 = vpack.c.b16 %v607, %v605
    %v686 = vpack.c.b16 %v608, %v606
    %v687 = vpack.c.b16 %v611, %v609
    %v688 = vpack.c.b16 %v612, %v610
    %v689 = vpack.c.b16 %v615, %v613
    %v690 = vpack.c.b16 %v616, %v614
    %v691 = vpack.c.b16 %v619, %v617
    %v692 = vpack.c.b16 %v620, %v618
    %v693 = vpack.c.b16 %v623, %v621
    %v694 = vpack.c.b16 %v624, %v622
    %v695 = vpack.c.b16 %v627, %v625
    %v696 = vpack.c.b16 %v628, %v626
    %v697 = vpack.c.b16 %v631, %v629
    %v698 = vpack.c.b16 %v632, %v630
    %v699 = vpack.c.b16 %v635, %v633
    %v700 = vpack.c.b16 %v636, %v634
    %765 = vmatprep.subr.bf16.mxu0 %v638
    %766 = vmatpush1.bf16.msra.mxu0 %v637
    %767 = vmatprep.subr.bf16.mxu0 %v640
    %768 = vmatpush1.bf16.msra.mxu0 %v639
    %769 = vmatprep.subr.bf16.mxu0 %v642
    %770 = vmatpush1.bf16.msra.mxu0 %v641
    %771 = vmatprep.subr.bf16.mxu0 %v644
    %772 = vmatpush1.bf16.msra.mxu0 %v643
    %773 = vmatprep.subr.bf16.mxu0 %v646
    %774 = vmatpush1.bf16.msra.mxu0 %v645
    %775 = vmatprep.subr.bf16.mxu0 %v648
    %776 = vmatpush1.bf16.msra.mxu0 %v647
    %777 = vmatprep.subr.bf16.mxu0 %v650
    %778 = vmatpush1.bf16.msra.mxu0 %v649
    %779 = vmatprep.subr.bf16.mxu0 %v652
    %780 = vmatpush1.bf16.msra.mxu0 %v651
    %781 = vmatprep.subr.bf16.mxu0 %v654
    %782 = vmatpush1.bf16.msra.mxu0 %v653
    %783 = vmatprep.subr.bf16.mxu0 %v656
    %784 = vmatpush1.bf16.msra.mxu0 %v655
    %785 = vmatprep.subr.bf16.mxu0 %v658
    %786 = vmatpush1.bf16.msra.mxu0 %v657
    %787 = vmatprep.subr.bf16.mxu0 %v660
    %788 = vmatpush1.bf16.msra.mxu0 %v659
    %789 = vmatprep.subr.bf16.mxu0 %v662
    %790 = vmatpush1.bf16.msra.mxu0 %v661
    %791 = vmatprep.subr.bf16.mxu0 %v664
    %792 = vmatpush1.bf16.msra.mxu0 %v663
    %793 = vmatprep.subr.bf16.mxu0 %v666
    %794 = vmatpush1.bf16.msra.mxu0 %v665
    %795 = vmatprep.subr.bf16.mxu0 %v668
    %796 = vmatpush1.bf16.msra.mxu0 %v667
    %797 = vmatprep.mubr.bf16.mxu0 %v366
    %798 = vmatmul.mubr.bf16.gmra.mrb[0].mxu0 %v365
    %v799 = vpop.f32.mrb[0].mxu0
    %v800 = vadd.f32 %v438, %v799
    %v801 = vpop.f32.mrb[0].mxu0
    %v802 = vadd.f32 %v442, %v801
    %v803 = vpop.f32.mrb[0].mxu0
    %v804 = vpop.f32.mrb[0].mxu0
    %805 = vdwg.mxu0
    %806 = vmatprep.subr.bf16.mxu0 %v670
    %807 = vmatpush1.bf16.msra.mxu0 %v669
    %808 = vmatprep.subr.bf16.mxu0 %v672
    %809 = vmatpush1.bf16.msra.mxu0 %v671
    %810 = vmatprep.subr.bf16.mxu0 %v674
    %811 = vmatpush1.bf16.msra.mxu0 %v673
    %812 = vmatprep.subr.bf16.mxu0 %v676
    %813 = vmatpush1.bf16.msra.mxu0 %v675
    %814 = vmatprep.subr.bf16.mxu0 %v678
    %815 = vmatpush1.bf16.msra.mxu0 %v677
    %816 = vmatprep.subr.bf16.mxu0 %v680
    %817 = vmatpush1.bf16.msra.mxu0 %v679
    %818 = vmatprep.subr.bf16.mxu0 %v682
    %819 = vmatpush1.bf16.msra.mxu0 %v681
    %820 = vmatprep.subr.bf16.mxu0 %v684
    %821 = vmatpush1.bf16.msra.mxu0 %v683
    %822 = vmatprep.subr.bf16.mxu0 %v686
    %823 = vmatpush1.bf16.msra.mxu0 %v685
    %824 = vmatprep.subr.bf16.mxu0 %v688
    %825 = vmatpush1.bf16.msra.mxu0 %v687
    %826 = vmatprep.subr.bf16.mxu0 %v690
    %827 = vmatpush1.bf16.msra.mxu0 %v689
    %828 = vmatprep.subr.bf16.mxu0 %v692
    %829 = vmatpush1.bf16.msra.mxu0 %v691
    %830 = vmatprep.subr.bf16.mxu0 %v694
    %831 = vmatpush1.bf16.msra.mxu0 %v693
    %832 = vmatprep.subr.bf16.mxu0 %v696
    %833 = vmatpush1.bf16.msra.mxu0 %v695
    %834 = vmatprep.subr.bf16.mxu0 %v698
    %835 = vmatpush1.bf16.msra.mxu0 %v697
    %836 = vmatprep.subr.bf16.mxu0 %v700
    %837 = vmatpush1.bf16.msra.mxu0 %v699
    %838 = vmatprep.mubr.bf16.mxu0 %v368
    %839 = vmatmul.mubr.bf16.gmra.mrb[0].mxu0 %v367
    %v840 = vpop.f32.mrb[0].mxu0
    %v841 = vadd.f32 %v800, %v840
    %v842 = vpop.f32.mrb[0].mxu0
    %v843 = vadd.f32 %v802, %v842
    %v844 = vpop.f32.mrb[0].mxu0
    %v845 = vpop.f32.mrb[0].mxu0
    %846 = vdwg.mxu0
    %v847 = vmax.f32 %v841, 0.0
    %v848 = vmax.f32 %v843, 0.0
    %v849 = vld [vmem:[%s7] sm:$0x3]
    %v851 = vlaneseq
    %v852 = vshrl.u32 %v851, 7
    %v853 = vsub.s32 0, %v852
    %v854 = vrot.slane %v849, %v853
    %v855 = vlaneseq
    %v856 = vshrl.u32 %v855, 7
    %v857 = vsub.s32 1, %v856
    %v858 = vrot.slane %v849, %v857
    %v861 = vmul.f32 %v847, %v854
    %v862 = vmul.f32 %v848, %v858
    %vm863 = vcmask 1041408
    %v864 = vsel %vm863, %v861, 0.0
    %v865 = vsel %vm863, %v862, 0.0
    %v866 = vadd.f32 %v864, %v865
    %867 = vadd.xlane.f32.xlu0 %v866
    %v868 = vpop.xlane.xlu0 %867
    %s869 = sld [smem:[#allocation2]]
    %v870 = vstv %s869
    %v871 = vadd.f32 %v868, %v870
    %v873 = vlaneseq
    %v874 = vand.u32 %v873, 127
    %v875 = vlaneseq
    %v876 = vshrl.u32 %v875, 7
    %v877 = vsub.s32 %v874, %v876
    %v878 = vrot.slane %v871, %v877
    %vm880 = vcmask 8192
    %881 = vst.msk [vmem:[#allocation11] sm:$0x1] %vm880, %v878
    // Predicated region
    $region54: #{critic_forward.1} parent=1 // pred_check
      _
    $region55: #{critic_forward.1} parent=1 // pred_check_branch
      %883 = sbr.rel (0) target = $region57
    $region56: #{critic_forward.1} parent=1 // pred_region
      %s885 = ssub.s32 16, 16
      %886 = vsyncadd [#allocation5], %s885
      %s888 = sshll.u32 [#allocation11], 4
      %s889 = int_to_ptr.vmem [resolvable:$true] %s888
      %891 = dma.vmem_to_hbm [thread:$0]  %s889, 16, %s9, [#allocation5]
    $region57: #{critic_forward.1} parent=1 // pred_fallthru
      _
    // Predicated region
    $region58: #{critic_forward.1} parent=1 // pred_check
      _
    $region59: #{critic_forward.1} parent=1 // pred_check_branch
      %893 = sbr.rel (0) target = $region61
    $region60: #{critic_forward.1} parent=1 // pred_region
      %894 = dma.done [#allocation5], 16
    $region61: #{critic_forward.1} parent=1 // pred_fallthru
      _
    %895 = vsyncpa [#allocation4], 1
    %896 = vsyncpa [#allocation7], 1
    %897 = vsyncpa [#allocation10], 1
    %898 = vsyncpa [#allocation5], 1

</llo_original>
